<compile_context>
chip_gen: v7x
topology: tpu7x:2x2x1
jax: 0.10.0
libtpu: 0.0.40
codegen_flags: <defaults>
</compile_context>

<pallas_src>
import jax
import jax.numpy as jnp
from jax.experimental import pallas as pl
from jax.experimental.pallas import tpu as pltpu

_LANES = 128
_MiB = 1024 * 1024


def _relu6_kernel(x_ref, o_ref):
    x = x_ref[...]
    zero = jnp.zeros((), dtype=x.dtype)
    six = jnp.asarray(6, dtype=x.dtype)
    o_ref[...] = jnp.minimum(jnp.maximum(x, zero), six)


def _round_up(a, m):
    return -(-a // m) * m


def _tpu_generation():
    """Returns (block_target_bytes, num_tensorcores, vmem_limit_cap_bytes)."""
    try:
        kind = jax.devices()[0].device_kind.lower()
    except Exception:  # pragma: no cover - defensive; default bucket below
        kind = ""
    if "v5 lite" in kind or "v5lite" in kind or "v5e" in kind:
        # v5e: ~820 GB/s HBM, 1 TC, 16 MiB scoped-VMEM default (128 MiB phys).
        return 3 * _MiB, 1, 32 * _MiB
    if "7" in kind:
        # v7x: ~3.2 TB/s HBM, 2 TCs, 64 MiB physical VMEM per TC.
        return 6 * _MiB, 2, 48 * _MiB
    # v6e-class default: 1 TC, 128 MiB physical VMEM.
    return 4 * _MiB, 1, 48 * _MiB


def _pick_row_tile(rows, itemsize, target_bytes, num_cores):
    """Pick a row tile: ~target_bytes blocks, multiple of 32 rows (sublane-pack
    safe for bf16/int8), full extent when the whole array fits one block.
    On multi-TC chips, cap the tile so the grid has >= 2 steps per core."""
    target = max(32, target_bytes // (_LANES * itemsize))  # multiple of 32
    cap = rows
    if num_cores >= 2:
        if rows >= 4 * 32:
            cap = _round_up(pl.cdiv(rows, 4), 32)   # >= ~4 programs
        elif rows >= 2 * 32:
            cap = _round_up(pl.cdiv(rows, 2), 32)   # at least give both cores work
    tile = min(target, cap)
    if tile >= rows:
        # Single full-extent block: always layout-legal regardless of divisibility.
        return rows
    return tile


def _relu6_2d(x2d, row_tile, vmem_cap_bytes):
    rows = x2d.shape[0]
    dtype = x2d.dtype
    itemsize = jnp.dtype(dtype).itemsize
    n = x2d.size

    block_bytes = row_tile * _LANES * itemsize
    # Cover double-buffered in+out (4 x block) with headroom, capped per chip.
    vmem_limit = int(min(vmem_cap_bytes, max(24 * _MiB, 5 * block_bytes)))

    cost = pl.CostEstimate(
        flops=2 * n,                      # one max + one min per element
        transcendentals=0,
        bytes_accessed=2 * n * itemsize,  # one read + one write pass over HBM
    )

    # TODO(synk): confirm via xprof that dimension_semantics=("parallel",)
    # shards this 1-D grid across both v7x TensorCores; if not, switch to an
    # explicit CORE_PARALLEL leading axis.
    return pl.pallas_call(
        _relu6_kernel,
        out_shape=jax.ShapeDtypeStruct((rows, _LANES), dtype),
        grid_spec=pltpu.PrefetchScalarGridSpec(
            num_scalar_prefetch=0,
            grid=(pl.cdiv(rows, row_tile),),  # ragged last block masked by Pallas
            in_specs=[pl.BlockSpec((row_tile, _LANES), lambda i: (i, 0))],
            out_specs=pl.BlockSpec((row_tile, _LANES), lambda i: (i, 0)),
        ),
        compiler_params=pltpu.CompilerParams(
            dimension_semantics=("parallel",),
            vmem_limit_bytes=vmem_limit,
        ),
        cost_estimate=cost,
    )(x2d)


def relu6_count_forward(x, tol=1e-6):
    """Forward of ReLU6Count: clamp(x, 0, 6). `tol` only affects backward
    bookkeeping in the original module, so it is unused here."""
    del tol  # forward semantics do not depend on tol
    orig_shape = x.shape
    dtype = x.dtype
    n = x.size
    if n == 0:
        return x
    itemsize = jnp.dtype(dtype).itemsize
    target_bytes, num_cores, vmem_cap = _tpu_generation()

    rem = n % _LANES
    if rem == 0:
        # Fast path (typical NCHW case): pure reshape, no HBM copy.
        rows = n // _LANES
        row_tile = _pick_row_tile(rows, itemsize, target_bytes, num_cores)
        out2d = _relu6_2d(x.reshape(rows, _LANES), row_tile, vmem_cap)
        return out2d.reshape(orig_shape)

    # Ragged case: kernel on the lane-aligned prefix, tiny jnp.clip on the
    # (<128-element) tail, one stitch. Avoids full-tensor pad + slice copies.
    rows = n // _LANES
    x_flat = x.reshape(-1)
    tail_out = jnp.clip(x_flat[rows * _LANES:], 0, 6).astype(dtype)
    if rows == 0:
        return tail_out.reshape(orig_shape)
    row_tile = _pick_row_tile(rows, itemsize, target_bytes, num_cores)
    main_out = _relu6_2d(x_flat[: rows * _LANES].reshape(rows, _LANES),
                         row_tile, vmem_cap)
    return jnp.concatenate([main_out.reshape(-1), tail_out]).reshape(orig_shape)


if __name__ == "__main__":
    key = jax.random.PRNGKey(0)

    # Primary small NCHW input; scale so values land < 0, in [0, 6], and > 6.
    x = jax.random.normal(key, (2, 4, 16, 16), dtype=jnp.float32) * 5.0
    y = jax.block_until_ready(relu6_count_forward(x, tol=1e-6))
    assert y.shape == x.shape and y.dtype == x.dtype
    assert jnp.allclose(y, jnp.clip(x, 0.0, 6.0)), "mismatch vs reference clamp"

    # Larger input: exercises grid > 1 (multi-block) on all generations.
    k2 = jax.random.PRNGKey(1)
    x2 = jax.random.normal(k2, (8, 64, 64, 64), dtype=jnp.float32) * 5.0
    y2 = jax.block_until_ready(relu6_count_forward(x2))
    assert jnp.allclose(y2, jnp.clip(x2, 0.0, 6.0)), "mismatch on multi-block path"

    # bf16 path (sublane packing, 32-row tile multiple).
    k3 = jax.random.PRNGKey(2)
    x3 = (jax.random.normal(k3, (4, 8, 32, 32), dtype=jnp.float32) * 5.0
          ).astype(jnp.bfloat16)
    y3 = jax.block_until_ready(relu6_count_forward(x3))
    assert y3.dtype == jnp.bfloat16
    assert jnp.allclose(y3.astype(jnp.float32),
                        jnp.clip(x3.astype(jnp.float32), 0.0, 6.0)), "bf16 mismatch"

    # Ragged input (numel not a multiple of 128): prefix kernel + clipped tail.
    k4 = jax.random.PRNGKey(3)
    x4 = jax.random.normal(k4, (3, 5, 7, 11), dtype=jnp.float32) * 5.0
    y4 = jax.block_until_ready(relu6_count_forward(x4))
    assert jnp.allclose(y4, jnp.clip(x4, 0.0, 6.0)), "mismatch on ragged path"

    # Tiny input (< 128 elements): pure tail path.
    k5 = jax.random.PRNGKey(4)
    x5 = jax.random.normal(k5, (1, 1, 3, 5), dtype=jnp.float32) * 5.0
    y5 = jax.block_until_ready(relu6_count_forward(x5))
    assert jnp.allclose(y5, jnp.clip(x5, 0.0, 6.0)), "mismatch on tiny path"

    print("KERNEL_OK")
</pallas_src>

<mosaic_0001>
module attributes {stable_mosaic.version = 11 : i64} {
  func.func @_relu6_kernel(%arg0: i32, %arg1: memref<16x128xf32, #tpu.memory_space<vmem>>, %arg2: memref<16x128xf32, #tpu.memory_space<vmem>>) attributes {dimension_semantics = [#tpu.dimension_semantics<parallel>], iteration_bounds = array<i64: 1>, scalar_prefetch = 0 : i64, scratch_operands = 0 : i64, tpu.core_type = #tpu.core_type<tc>, window_params = [{transform_indices = @transform_0, window_bounds = array<i64: 16, 128>}, {transform_indices = @transform_1, window_bounds = array<i64: 16, 128>}]} {
    %c0 = arith.constant 0 : index
    %c0_0 = arith.constant 0 : index
    %0 = vector.load %arg1[%c0, %c0_0] : memref<16x128xf32, #tpu.memory_space<vmem>>, vector<16x128xf32>
    %cst = arith.constant 0.000000e+00 : f32
    %1 = vector.broadcast %cst : f32 to vector<16x128xf32>
    %2 = arith.maximumf %0, %1 : vector<16x128xf32>
    %cst_1 = arith.constant 6.000000e+00 : f32
    %3 = vector.broadcast %cst_1 : f32 to vector<16x128xf32>
    %4 = arith.minimumf %2, %3 : vector<16x128xf32>
    %c0_2 = arith.constant 0 : index
    %c0_3 = arith.constant 0 : index
    %5 = vector.load %arg2[%c0_2, %c0_3] : memref<16x128xf32, #tpu.memory_space<vmem>>, vector<16x128xf32>
    tpu.vector_store %arg2[%c0_2, %c0_3], %4 {strides = array<i32>} : memref<16x128xf32, #tpu.memory_space<vmem>>, vector<16x128xf32>,
    return
  }
  func.func @transform_0(%arg0: i32) -> (i32, i32) {
    %c0_i32 = arith.constant 0 : i32
    %c0_i32_0 = arith.constant 0 : i32
    return %arg0, %c0_i32 : i32, i32
  }
  func.func @transform_1(%arg0: i32) -> (i32, i32) {
    %c0_i32 = arith.constant 0 : i32
    %c0_i32_0 = arith.constant 0 : i32
    return %arg0, %c0_i32 : i32, i32
  }
}

</mosaic_0001>

<llo_original>
// kernel: tpu_custom_call.1
$region0: #{tpu_custom_call.1}
  #allocation0 [shape = 'u32[]', space=smem, size = 0x4, offset = 0x4, fixed_abs, tag = 'smem constant byte address 0x4 - core index']
  #allocation1 [shape = 'u32[144,128]{1,0:T(1,128)}', space=vmem, size = 0x12000, scoped, tag = 'internal scratch']
  %s0 = inlined_call_operand.hbm [shape: f32[16,128], index: 0, kind: input, shape index: {}]
  %s1 = inlined_call_operand.hbm [shape: f32[16,128], index: 1, kind: output, shape index: {}]
  %s2 = sld [smem:[#allocation0]]
  $region18: #{tpu_custom_call.1} parent=0
    _
  %s4 = ssub.s32 1, %s2
  %s5 = scalar_select 0, %s4, %s2
  $region1: #{tpu_custom_call.1} parent=0
    #allocation2 [shape = 'u8[8192]{0}', space=vmem, size = 0x2000, scoped, tag = 'input window, operand 0, single buffered']
    #allocation3 [shape = 's32[1]{0}', space=sflag, size = 0x4, scoped, tag = 'scoped memory for tpu_custom_call.1']
    #allocation4 [shape = 's32[1]{0}', space=sflag, size = 0x4, scoped, tag = 'scoped memory for tpu_custom_call.1']
    #allocation5 [shape = 'u8[8192]{0}', space=vmem, size = 0x2000, scoped, tag = 'output window, operand 0, single buffered']
    %6 = vsyncpa [#allocation3], 0
    %7 = vsyncpa [#allocation4], 0
    // Predicated region
    $region2: #{tpu_custom_call.1} parent=1 // pred_check
      _
    $region3: #{tpu_custom_call.1} parent=1 // pred_check_branch
      %9 = sbr.rel (0) target = $region5
    $region4: #{tpu_custom_call.1} parent=1 // pred_region
      %s11 = ssub.s32 256, 256
      %12 = vsyncadd [#allocation3], %s11
      %s13 = sshll.u32 [#allocation2], 4
      %s14 = int_to_ptr.vmem [resolvable:$true] %s13
      %19 = dma.hbm_to_vmem [thread:$0]  %s0, 256, %s14, [#allocation3], 128, 128, 8
    $region5: #{tpu_custom_call.1} parent=1 // pred_fallthru
      _
    // Predicated region
    $region6: #{tpu_custom_call.1} parent=1 // pred_check
      _
    $region7: #{tpu_custom_call.1} parent=1 // pred_check_branch
      %21 = sbr.rel (0) target = $region9
    $region8: #{tpu_custom_call.1} parent=1 // pred_region
      %22 = dma.done [#allocation3], 256
    $region9: #{tpu_custom_call.1} parent=1 // pred_fallthru
      _
    %v23 = vld [vmem:[#allocation2] sm:$0xff]
    %v24 = vld [vmem:[#allocation2 + $0x8] sm:$0xff]
    %v25 = vmax.f32 %v23, 0.0
    %v26 = vmax.f32 %v24, 0.0
    %v27 = vmin.f32 %v25, 6.0
    %v28 = vmin.f32 %v26, 6.0
    %29 = vst [vmem:[#allocation5] sm:$0xff] %v27
    %30 = vst [vmem:[#allocation5 + $0x8] sm:$0xff] %v28
    // Predicated region
    $region10: #{tpu_custom_call.1} parent=1 // pred_check
      _
    $region11: #{tpu_custom_call.1} parent=1 // pred_check_branch
      %32 = sbr.rel (0) target = $region13
    $region12: #{tpu_custom_call.1} parent=1 // pred_region
      %s34 = ssub.s32 256, 256
      %35 = vsyncadd [#allocation4], %s34
      %s36 = sshll.u32 [#allocation5], 4
      %s37 = int_to_ptr.vmem [resolvable:$true] %s36
      %42 = dma.vmem_to_hbm [thread:$0]  %s37, 256, %s1, [#allocation4], 128, 128, 8
    $region13: #{tpu_custom_call.1} parent=1 // pred_fallthru
      _
    // Predicated region
    $region14: #{tpu_custom_call.1} parent=1 // pred_check
      _
    $region15: #{tpu_custom_call.1} parent=1 // pred_check_branch
      %44 = sbr.rel (0) target = $region17
    $region16: #{tpu_custom_call.1} parent=1 // pred_region
      %45 = dma.done [#allocation4], 256
    $region17: #{tpu_custom_call.1} parent=1 // pred_fallthru
      _
    %46 = vsyncpa [#allocation3], 1
    %47 = vsyncpa [#allocation4], 1

</llo_original>
